<compile_context>
chip_gen: v7x
topology: tpu7x:2x2x1
jax: 0.10.0
libtpu: 0.0.40
codegen_flags: <defaults>
</compile_context>

<pallas_src>
import functools

import jax
import jax.numpy as jnp
from jax.experimental import pallas as pl
from jax.experimental.pallas import tpu as pltpu


# --------------------------- fused forward kernel ----------------------------

def _fused_nnetwork_kernel(ids_ref, gx1tab_ref, w_hh1_ref, w_ih2_ref,
                           w_hh2_ref, b2_ref, y_ref, wh_ref, bh_ref,
                           out_ref, last_ref, *, target):
    B = out_ref.shape[0]              # real batch = LSTM time steps
    H = w_hh1_ref.shape[0]            # hidden size
    vocab = gx1tab_ref.shape[0]
    nlane = out_ref.shape[1]          # 128 (lane-dense packed output)

    # ---- embedding lookup + layer-1 input projection, fully hoisted ---------
    # gx1tab = emb @ W_ih1^T + (b_ih1 + b_hh1) was precomputed off the hot
    # path; a one-hot matmul performs the gather on the MXU in one shot.
    lane_v = jax.lax.broadcasted_iota(jnp.int32, (B, vocab), 1)
    onehot = (lane_v == ids_ref[...]).astype(jnp.float32)          # (B, vocab)
    gx1 = jnp.dot(onehot, gx1tab_ref[...],
                  preferred_element_type=jnp.float32)              # (B, 4H)

    w_hh1 = w_hh1_ref[...]            # (H, 4H)
    w_ih2 = w_ih2_ref[...]            # (H, 4H)
    w_hh2 = w_hh2_ref[...]            # (H, 4H)
    b2 = b2_ref[...]                  # (1, 4H)

    def cell(gates, c):
        # Gates are pre-ordered [i, f, o, g]: one sigmoid over a contiguous
        # (1, 3H) slice + one tanh over (1, H) — minimal EUP traffic.
        sig = jax.nn.sigmoid(gates[:, :3 * H])
        i, f, o = sig[:, :H], sig[:, H:2 * H], sig[:, 2 * H:3 * H]
        g = jnp.tanh(gates[:, 3 * H:])
        c_new = f * c + i * g
        return o * jnp.tanh(c_new), c_new

    zeros = jnp.zeros((1, H), jnp.float32)
    h1, c1, h2, c2 = zeros, zeros, zeros, zeros

    # Only LSTM-batch column T-1 reaches the heads (batch_first quirk), and
    # columns are independent with zero-init state -> effective LSTM batch = 1.
    # TODO(synk): for large B switch to lax.fori_loop(..., unroll=4/8) with
    # h/c carries in VMEM scratch instead of a fully unrolled Python loop.
    for t in range(B):
        g1 = gx1[t:t + 1, :] + jnp.dot(h1, w_hh1,
                                       preferred_element_type=jnp.float32)
        h1, c1 = cell(g1, c1)
        g2 = (jnp.dot(h1, w_ih2, preferred_element_type=jnp.float32)
              + jnp.dot(h2, w_hh2, preferred_element_type=jnp.float32) + b2)
        h2, c2 = cell(g2, c2)
        last_ref[pl.ds(t, 1), :] = h2                   # = lstm_out2[t, -1, :]

    # ---- heads: one lane-dense (B, 128) matmul, masked log-softmax ----------
    feat = last_ref[...] * y_ref[...]                              # (B, H)
    z = jnp.dot(feat, wh_ref[...],
                preferred_element_type=jnp.float32) + bh_ref[...]  # (B, 128)

    lane = jax.lax.broadcasted_iota(jnp.int32, z.shape, 1)
    is_aspect = lane < target
    masked = jnp.where(is_aspect, z, -1e30)          # keep pad lanes out of LSE
    m = jnp.max(masked, axis=1, keepdims=True)
    lse = m + jnp.log(jnp.sum(jnp.exp(masked - m), axis=1, keepdims=True))
    senti = jax.nn.sigmoid(z)                        # lane 127 is the real one
    out_ref[...] = jnp.where(is_aspect, masked - lse,
                             jnp.where(lane == nlane - 1, senti, 0.0))


def nnetwork_forward(prepped, x, y, *, target_size):
    """x: (B, T) int32 token ids, y: (B,) float. Returns (senti, aspect)."""
    B = x.shape[0]
    H = prepped["w_hh1"].shape[0]
    vocab, gdim = prepped["gx1tab"].shape            # (vocab, 4H)
    nlane = prepped["w_heads"].shape[1]              # 128

    # Only the last-token column ever reaches the heads -> pass just its ids.
    ids2 = x[:, -1:].astype(jnp.int32)               # (B, 1)
    y2 = y.reshape(-1, 1).astype(jnp.float32)        # (B, 1)

    kernel = functools.partial(_fused_nnetwork_kernel, target=target_size)
    vmem = pl.BlockSpec(memory_space=pltpu.MemorySpace.VMEM)

    flops = 2 * (B * vocab * gdim            # one-hot gather matmul
                 + 3 * B * H * gdim          # recurrent matmuls (hh1, ih2, hh2)
                 + B * H * nlane)            # fused heads
    transcendentals = B * (2 * 5 * H + 2 * nlane)
    bytes_accessed = 4 * (vocab * gdim + 3 * H * gdim + gdim
                          + (H + 1) * nlane + 2 * B + B * nlane)

    # TODO(synk): at scale add pltpu.CompilerParams(vmem_limit_bytes=...),
    # bf16 weights (f32 accumulate), and a 'parallel' grid axis over B so the
    # two v7x TensorCores split the work.
    packed = pl.pallas_call(
        kernel,
        out_shape=jax.ShapeDtypeStruct((B, nlane), jnp.float32),
        in_specs=[vmem] * 9,
        out_specs=vmem,
        scratch_shapes=[pltpu.VMEM((B, H), jnp.float32)],
        cost_estimate=pl.CostEstimate(flops=flops,
                                      transcendentals=transcendentals,
                                      bytes_accessed=bytes_accessed),
    )(ids2, prepped["gx1tab"], prepped["w_hh1"], prepped["w_ih2"],
      prepped["w_hh2"], prepped["b2"], y2, prepped["w_heads"],
      prepped["b_heads"])

    aspect = packed[:, :target_size]
    senti = packed[:, nlane - 1:nlane]
    return senti, aspect


# ----------------------- params (PyTorch layout) & prep -----------------------

def init_params(key, hidden_dim, embedding_dim, vocab_size, target_size, pad_id):
    ks = jax.random.split(key, 12)
    s = 1.0 / jnp.sqrt(hidden_dim)

    def u(k, shape):
        return jax.random.uniform(k, shape, jnp.float32, minval=-s, maxval=s)

    emb = jax.random.normal(ks[0], (vocab_size, embedding_dim), jnp.float32)
    emb = emb.at[pad_id].set(0.0)                       # padding_idx row zero

    return {
        "emb":    emb,
        "w_ih1":  u(ks[1], (4 * hidden_dim, embedding_dim)),
        "w_hh1":  u(ks[2], (4 * hidden_dim, hidden_dim)),
        "b_ih1":  u(ks[3], (4 * hidden_dim,)),
        "b_hh1":  u(ks[4], (4 * hidden_dim,)),
        "w_ih2":  u(ks[5], (4 * hidden_dim, hidden_dim)),
        "w_hh2":  u(ks[6], (4 * hidden_dim, hidden_dim)),
        "b_ih2":  u(ks[7], (4 * hidden_dim,)),
        "b_hh2":  u(ks[8], (4 * hidden_dim,)),
        "w_lin":  u(ks[9], (target_size, hidden_dim)),
        "b_lin":  u(ks[10], (target_size,)),
        "w_sent": u(ks[11], (1, hidden_dim)),
        "b_sent": jnp.zeros((1,), jnp.float32),
    }


def prepare_params(raw):
    """One-time parameter prep (transposes, gate reorder, bias fusion, table
    pre-projection, lane-dense head packing) — all off the per-call hot path."""
    H = raw["w_hh1"].shape[1]
    target = raw["w_lin"].shape[0]
    NLANE = 128

    def ifog(a):
        # PyTorch gate order [i, f, g, o] (leading axis) -> [i, f, o, g] so the
        # kernel applies one sigmoid to 3H contiguous lanes and one tanh to H.
        return jnp.concatenate([a[:2 * H], a[3 * H:4 * H], a[2 * H:3 * H]],
                               axis=0)

    # Layer-1 input path fully hoisted: project the whole embedding table
    # through W_ih1 and fold both layer-1 biases once.
    gx1tab = (raw["emb"] @ ifog(raw["w_ih1"]).T
              + ifog(raw["b_ih1"] + raw["b_hh1"]))            # (vocab, 4H)

    # Lane-dense fused heads: aspect weights in lanes 0..target-1, sentiment
    # weight in lane 127, everything else zero (masked in-kernel).
    w_heads = jnp.zeros((H, NLANE), jnp.float32)
    w_heads = w_heads.at[:, :target].set(raw["w_lin"].T)
    w_heads = w_heads.at[:, NLANE - 1].set(raw["w_sent"][0])
    b_heads = jnp.zeros((1, NLANE), jnp.float32)
    b_heads = b_heads.at[0, :target].set(raw["b_lin"])
    b_heads = b_heads.at[0, NLANE - 1].set(raw["b_sent"][0])

    return {
        "gx1tab":  gx1tab,                                    # (vocab, 4H)
        "w_hh1":   ifog(raw["w_hh1"]).T,                      # (H, 4H)
        "w_ih2":   ifog(raw["w_ih2"]).T,                      # (H, 4H)
        "w_hh2":   ifog(raw["w_hh2"]).T,                      # (H, 4H)
        "b2":      ifog(raw["b_ih2"] + raw["b_hh2"]).reshape(1, -1),  # (1, 4H)
        "w_heads": w_heads,                                   # (H, 128)
        "b_heads": b_heads,                                   # (1, 128)
    }


# ------------------------------ pure-JAX reference ----------------------------

def _reference_forward(raw, x, y):
    emb = jnp.take(raw["emb"], x, axis=0)

    def lstm(seq, w_ih, w_hh, b_ih, b_hh):
        T_, C_, _ = seq.shape
        H_ = w_hh.shape[1]
        h = jnp.zeros((C_, H_), jnp.float32)
        c = jnp.zeros((C_, H_), jnp.float32)
        outs = []
        for t in range(T_):
            g = seq[t] @ w_ih.T + h @ w_hh.T + b_ih + b_hh
            i = jax.nn.sigmoid(g[:, :H_])
            f = jax.nn.sigmoid(g[:, H_:2 * H_])
            gg = jnp.tanh(g[:, 2 * H_:3 * H_])
            o = jax.nn.sigmoid(g[:, 3 * H_:])
            c = f * c + i * gg
            h = o * jnp.tanh(c)
            outs.append(h)
        return jnp.stack(outs, axis=0)

    o1 = lstm(emb, raw["w_ih1"], raw["w_hh1"], raw["b_ih1"], raw["b_hh1"])
    o2 = lstm(o1, raw["w_ih2"], raw["w_hh2"], raw["b_ih2"], raw["b_hh2"])
    feat = o2[:, -1, :] * y.reshape(-1, 1)
    aspect = jax.nn.log_softmax(feat @ raw["w_lin"].T + raw["b_lin"], axis=1)
    senti = jax.nn.sigmoid(feat @ raw["w_sent"].T + raw["b_sent"])
    return senti, aspect


# ------------------------------------ main ------------------------------------

if __name__ == "__main__":
    hidden_dim, embedding_dim = 32, 16
    vocab_size, target_size, pad_id = 50, 5, 0
    B, T = 2, 8                                   # batch (= LSTM time), seq len

    key = jax.random.PRNGKey(0)
    kp, kx, ky = jax.random.split(key, 3)

    raw = init_params(kp, hidden_dim, embedding_dim, vocab_size,
                      target_size, pad_id)
    prepped = prepare_params(raw)                 # one-time, off hot path

    x = jax.random.randint(kx, (B, T), 0, vocab_size, dtype=jnp.int32)
    y = jax.random.bernoulli(ky, 0.5, (B,)).astype(jnp.float32)

    fwd = jax.jit(nnetwork_forward, static_argnames="target_size")
    senti, aspect = fwd(prepped, x, y, target_size=target_size)
    jax.block_until_ready((senti, aspect))

    assert senti.shape == (B, 1) and aspect.shape == (B, target_size)

    senti_ref, aspect_ref = jax.jit(_reference_forward)(raw, x, y)
    assert jnp.allclose(senti, senti_ref, rtol=1e-4, atol=1e-4)
    assert jnp.allclose(aspect, aspect_ref, rtol=1e-4, atol=1e-4)

    print("KERNEL_OK")
</pallas_src>

<mosaic_0001>
module attributes {stable_mosaic.version = 11 : i64} {
  func.func @_fused_nnetwork_kernel(%arg0: memref<2x1xi32, #tpu.memory_space<vmem>>, %arg1: memref<50x128xf32, #tpu.memory_space<vmem>>, %arg2: memref<32x128xf32, #tpu.memory_space<vmem>>, %arg3: memref<32x128xf32, #tpu.memory_space<vmem>>, %arg4: memref<32x128xf32, #tpu.memory_space<vmem>>, %arg5: memref<1x128xf32, #tpu.memory_space<vmem>>, %arg6: memref<2x1xf32, #tpu.memory_space<vmem>>, %arg7: memref<32x128xf32, #tpu.memory_space<vmem>>, %arg8: memref<1x128xf32, #tpu.memory_space<vmem>>, %arg9: memref<2x128xf32, #tpu.memory_space<vmem>>, %arg10: memref<2x32xf32, #tpu.memory_space<vmem>>) attributes {dimension_semantics = [], scalar_prefetch = 0 : i64, scratch_operands = 1 : i64, tpu.core_type = #tpu.core_type<tc>} {
    %0 = tpu.iota {dimensions = array<i32: 1>} : vector<2x50xi32>
    %c0 = arith.constant 0 : index
    %c0_0 = arith.constant 0 : index
    %1 = vector.load %arg0[%c0, %c0_0] : memref<2x1xi32, #tpu.memory_space<vmem>>, vector<2x1xi32>
    %2 = vector.broadcast %1 : vector<2x1xi32> to vector<2x50xi32>
    %3 = arith.cmpi eq, %0, %2 : vector<2x50xi32>
    %4 = arith.extui %3 : vector<2x50xi1> to vector<2x50xi32>
    %5 = arith.sitofp %4 : vector<2x50xi32> to vector<2x50xf32>
    %c0_1 = arith.constant 0 : index
    %c0_2 = arith.constant 0 : index
    %6 = vector.load %arg1[%c0_1, %c0_2] : memref<50x128xf32, #tpu.memory_space<vmem>>, vector<50x128xf32>
    %cst = arith.constant dense<0.000000e+00> : vector<2x128xf32>
    %7 = tpu.matmul %5, %6, %cst {dimension_numbers = #tpu.dot_dimension_numbers<[1], [0], [0], [1], [0, 0, 1, 1], [], []>} : vector<2x50xf32>, vector<50x128xf32>, vector<2x128xf32> -> vector<2x128xf32>
    %c0_3 = arith.constant 0 : index
    %c0_4 = arith.constant 0 : index
    %8 = vector.load %arg2[%c0_3, %c0_4] : memref<32x128xf32, #tpu.memory_space<vmem>>, vector<32x128xf32>
    %c0_5 = arith.constant 0 : index
    %c0_6 = arith.constant 0 : index
    %9 = vector.load %arg3[%c0_5, %c0_6] : memref<32x128xf32, #tpu.memory_space<vmem>>, vector<32x128xf32>
    %c0_7 = arith.constant 0 : index
    %c0_8 = arith.constant 0 : index
    %10 = vector.load %arg4[%c0_7, %c0_8] : memref<32x128xf32, #tpu.memory_space<vmem>>, vector<32x128xf32>
    %c0_9 = arith.constant 0 : index
    %c0_10 = arith.constant 0 : index
    %11 = vector.load %arg5[%c0_9, %c0_10] : memref<1x128xf32, #tpu.memory_space<vmem>>, vector<1x128xf32>
    %cst_11 = arith.constant 0.000000e+00 : f32
    %12 = vector.broadcast %cst_11 : f32 to vector<1x32xf32>
    %13 = vector.extract_strided_slice %7 {offsets = [0, 0], sizes = [1, 128], strides = [1, 1]} : vector<2x128xf32> to vector<1x128xf32>
    %cst_12 = arith.constant dense<0.000000e+00> : vector<1x128xf32>
    %14 = tpu.matmul %12, %8, %cst_12 {dimension_numbers = #tpu.dot_dimension_numbers<[1], [0], [0], [1], [0, 0, 1, 1], [], []>} : vector<1x32xf32>, vector<32x128xf32>, vector<1x128xf32> -> vector<1x128xf32>
    %15 = arith.addf %13, %14 : vector<1x128xf32>
    %16 = vector.extract_strided_slice %15 {offsets = [0, 0], sizes = [1, 96], strides = [1, 1]} : vector<1x128xf32> to vector<1x96xf32>
    %17 = arith.negf %16 : vector<1x96xf32>
    %18 = math.exp %17 : vector<1x96xf32>
    %cst_13 = arith.constant 1.000000e+00 : f32
    %19 = vector.broadcast %cst_13 : f32 to vector<1x96xf32>
    %20 = arith.addf %19, %18 : vector<1x96xf32>
    %21 = arith.divf %19, %20 : vector<1x96xf32>
    %22 = vector.extract_strided_slice %21 {offsets = [0, 0], sizes = [1, 32], strides = [1, 1]} : vector<1x96xf32> to vector<1x32xf32>
    %23 = vector.extract_strided_slice %21 {offsets = [0, 32], sizes = [1, 32], strides = [1, 1]} : vector<1x96xf32> to vector<1x32xf32>
    %24 = vector.extract_strided_slice %21 {offsets = [0, 64], sizes = [1, 32], strides = [1, 1]} : vector<1x96xf32> to vector<1x32xf32>
    %25 = vector.extract_strided_slice %15 {offsets = [0, 96], sizes = [1, 32], strides = [1, 1]} : vector<1x128xf32> to vector<1x32xf32>
    %26 = math.tanh %25 : vector<1x32xf32>
    %27 = arith.mulf %23, %12 : vector<1x32xf32>
    %28 = arith.mulf %22, %26 : vector<1x32xf32>
    %29 = arith.addf %27, %28 : vector<1x32xf32>
    %30 = math.tanh %29 : vector<1x32xf32>
    %31 = arith.mulf %24, %30 : vector<1x32xf32>
    %cst_14 = arith.constant dense<0.000000e+00> : vector<1x128xf32>
    %32 = tpu.matmul %31, %9, %cst_14 {dimension_numbers = #tpu.dot_dimension_numbers<[1], [0], [0], [1], [0, 0, 1, 1], [], []>} : vector<1x32xf32>, vector<32x128xf32>, vector<1x128xf32> -> vector<1x128xf32>
    %cst_15 = arith.constant dense<0.000000e+00> : vector<1x128xf32>
    %33 = tpu.matmul %12, %10, %cst_15 {dimension_numbers = #tpu.dot_dimension_numbers<[1], [0], [0], [1], [0, 0, 1, 1], [], []>} : vector<1x32xf32>, vector<32x128xf32>, vector<1x128xf32> -> vector<1x128xf32>
    %34 = arith.addf %32, %33 : vector<1x128xf32>
    %35 = arith.addf %34, %11 : vector<1x128xf32>
    %36 = vector.extract_strided_slice %35 {offsets = [0, 0], sizes = [1, 96], strides = [1, 1]} : vector<1x128xf32> to vector<1x96xf32>
    %37 = arith.negf %36 : vector<1x96xf32>
    %38 = math.exp %37 : vector<1x96xf32>
    %cst_16 = arith.constant 1.000000e+00 : f32
    %39 = vector.broadcast %cst_16 : f32 to vector<1x96xf32>
    %40 = arith.addf %39, %38 : vector<1x96xf32>
    %41 = arith.divf %39, %40 : vector<1x96xf32>
    %42 = vector.extract_strided_slice %41 {offsets = [0, 0], sizes = [1, 32], strides = [1, 1]} : vector<1x96xf32> to vector<1x32xf32>
    %43 = vector.extract_strided_slice %41 {offsets = [0, 32], sizes = [1, 32], strides = [1, 1]} : vector<1x96xf32> to vector<1x32xf32>
    %44 = vector.extract_strided_slice %41 {offsets = [0, 64], sizes = [1, 32], strides = [1, 1]} : vector<1x96xf32> to vector<1x32xf32>
    %45 = vector.extract_strided_slice %35 {offsets = [0, 96], sizes = [1, 32], strides = [1, 1]} : vector<1x128xf32> to vector<1x32xf32>
    %46 = math.tanh %45 : vector<1x32xf32>
    %47 = arith.mulf %43, %12 : vector<1x32xf32>
    %48 = arith.mulf %42, %46 : vector<1x32xf32>
    %49 = arith.addf %47, %48 : vector<1x32xf32>
    %50 = math.tanh %49 : vector<1x32xf32>
    %51 = arith.mulf %44, %50 : vector<1x32xf32>
    %c0_17 = arith.constant 0 : index
    %c0_18 = arith.constant 0 : index
    %52 = vector.load %arg10[%c0_17, %c0_18] : memref<2x32xf32, #tpu.memory_space<vmem>>, vector<1x32xf32>
    tpu.vector_store %arg10[%c0_17, %c0_18], %51 {strides = array<i32>} : memref<2x32xf32, #tpu.memory_space<vmem>>, vector<1x32xf32>,
    %53 = vector.extract_strided_slice %7 {offsets = [1, 0], sizes = [1, 128], strides = [1, 1]} : vector<2x128xf32> to vector<1x128xf32>
    %cst_19 = arith.constant dense<0.000000e+00> : vector<1x128xf32>
    %54 = tpu.matmul %31, %8, %cst_19 {dimension_numbers = #tpu.dot_dimension_numbers<[1], [0], [0], [1], [0, 0, 1, 1], [], []>} : vector<1x32xf32>, vector<32x128xf32>, vector<1x128xf32> -> vector<1x128xf32>
    %55 = arith.addf %53, %54 : vector<1x128xf32>
    %56 = vector.extract_strided_slice %55 {offsets = [0, 0], sizes = [1, 96], strides = [1, 1]} : vector<1x128xf32> to vector<1x96xf32>
    %57 = arith.negf %56 : vector<1x96xf32>
    %58 = math.exp %57 : vector<1x96xf32>
    %cst_20 = arith.constant 1.000000e+00 : f32
    %59 = vector.broadcast %cst_20 : f32 to vector<1x96xf32>
    %60 = arith.addf %59, %58 : vector<1x96xf32>
    %61 = arith.divf %59, %60 : vector<1x96xf32>
    %62 = vector.extract_strided_slice %61 {offsets = [0, 0], sizes = [1, 32], strides = [1, 1]} : vector<1x96xf32> to vector<1x32xf32>
    %63 = vector.extract_strided_slice %61 {offsets = [0, 32], sizes = [1, 32], strides = [1, 1]} : vector<1x96xf32> to vector<1x32xf32>
    %64 = vector.extract_strided_slice %61 {offsets = [0, 64], sizes = [1, 32], strides = [1, 1]} : vector<1x96xf32> to vector<1x32xf32>
    %65 = vector.extract_strided_slice %55 {offsets = [0, 96], sizes = [1, 32], strides = [1, 1]} : vector<1x128xf32> to vector<1x32xf32>
    %66 = math.tanh %65 : vector<1x32xf32>
    %67 = arith.mulf %63, %29 : vector<1x32xf32>
    %68 = arith.mulf %62, %66 : vector<1x32xf32>
    %69 = arith.addf %67, %68 : vector<1x32xf32>
    %70 = math.tanh %69 : vector<1x32xf32>
    %71 = arith.mulf %64, %70 : vector<1x32xf32>
    %cst_21 = arith.constant dense<0.000000e+00> : vector<1x128xf32>
    %72 = tpu.matmul %71, %9, %cst_21 {dimension_numbers = #tpu.dot_dimension_numbers<[1], [0], [0], [1], [0, 0, 1, 1], [], []>} : vector<1x32xf32>, vector<32x128xf32>, vector<1x128xf32> -> vector<1x128xf32>
    %cst_22 = arith.constant dense<0.000000e+00> : vector<1x128xf32>
    %73 = tpu.matmul %51, %10, %cst_22 {dimension_numbers = #tpu.dot_dimension_numbers<[1], [0], [0], [1], [0, 0, 1, 1], [], []>} : vector<1x32xf32>, vector<32x128xf32>, vector<1x128xf32> -> vector<1x128xf32>
    %74 = arith.addf %72, %73 : vector<1x128xf32>
    %75 = arith.addf %74, %11 : vector<1x128xf32>
    %76 = vector.extract_strided_slice %75 {offsets = [0, 0], sizes = [1, 96], strides = [1, 1]} : vector<1x128xf32> to vector<1x96xf32>
    %77 = arith.negf %76 : vector<1x96xf32>
    %78 = math.exp %77 : vector<1x96xf32>
    %cst_23 = arith.constant 1.000000e+00 : f32
    %79 = vector.broadcast %cst_23 : f32 to vector<1x96xf32>
    %80 = arith.addf %79, %78 : vector<1x96xf32>
    %81 = arith.divf %79, %80 : vector<1x96xf32>
    %82 = vector.extract_strided_slice %81 {offsets = [0, 0], sizes = [1, 32], strides = [1, 1]} : vector<1x96xf32> to vector<1x32xf32>
    %83 = vector.extract_strided_slice %81 {offsets = [0, 32], sizes = [1, 32], strides = [1, 1]} : vector<1x96xf32> to vector<1x32xf32>
    %84 = vector.extract_strided_slice %81 {offsets = [0, 64], sizes = [1, 32], strides = [1, 1]} : vector<1x96xf32> to vector<1x32xf32>
    %85 = vector.extract_strided_slice %75 {offsets = [0, 96], sizes = [1, 32], strides = [1, 1]} : vector<1x128xf32> to vector<1x32xf32>
    %86 = math.tanh %85 : vector<1x32xf32>
    %87 = arith.mulf %83, %49 : vector<1x32xf32>
    %88 = arith.mulf %82, %86 : vector<1x32xf32>
    %89 = arith.addf %87, %88 : vector<1x32xf32>
    %90 = math.tanh %89 : vector<1x32xf32>
    %91 = arith.mulf %84, %90 : vector<1x32xf32>
    %c1 = arith.constant 1 : index
    %c0_24 = arith.constant 0 : index
    %92 = vector.load %arg10[%c1, %c0_24] : memref<2x32xf32, #tpu.memory_space<vmem>>, vector<1x32xf32>
    tpu.vector_store %arg10[%c1, %c0_24], %91 {strides = array<i32>} : memref<2x32xf32, #tpu.memory_space<vmem>>, vector<1x32xf32>,
    %c0_25 = arith.constant 0 : index
    %c0_26 = arith.constant 0 : index
    %93 = vector.load %arg10[%c0_25, %c0_26] : memref<2x32xf32, #tpu.memory_space<vmem>>, vector<2x32xf32>
    %c0_27 = arith.constant 0 : index
    %c0_28 = arith.constant 0 : index
    %94 = vector.load %arg6[%c0_27, %c0_28] : memref<2x1xf32, #tpu.memory_space<vmem>>, vector<2x1xf32>
    %95 = vector.broadcast %94 : vector<2x1xf32> to vector<2x32xf32>
    %96 = arith.mulf %93, %95 : vector<2x32xf32>
    %c0_29 = arith.constant 0 : index
    %c0_30 = arith.constant 0 : index
    %97 = vector.load %arg7[%c0_29, %c0_30] : memref<32x128xf32, #tpu.memory_space<vmem>>, vector<32x128xf32>
    %cst_31 = arith.constant dense<0.000000e+00> : vector<2x128xf32>
    %98 = tpu.matmul %96, %97, %cst_31 {dimension_numbers = #tpu.dot_dimension_numbers<[1], [0], [0], [1], [0, 0, 1, 1], [], []>} : vector<2x32xf32>, vector<32x128xf32>, vector<2x128xf32> -> vector<2x128xf32>
    %c0_32 = arith.constant 0 : index
    %c0_33 = arith.constant 0 : index
    %99 = vector.load %arg8[%c0_32, %c0_33] : memref<1x128xf32, #tpu.memory_space<vmem>>, vector<1x128xf32>
    %100 = vector.broadcast %99 : vector<1x128xf32> to vector<2x128xf32>
    %101 = arith.addf %98, %100 : vector<2x128xf32>
    %102 = tpu.iota {dimensions = array<i32: 1>} : vector<2x128xi32>
    %c5_i32 = arith.constant 5 : i32
    %103 = vector.broadcast %c5_i32 : i32 to vector<2x128xi32>
    %104 = arith.cmpi slt, %102, %103 : vector<2x128xi32>
    %cst_34 = arith.constant -1.000000e+30 : f32
    %105 = vector.broadcast %cst_34 : f32 to vector<2x128xf32>
    %106 = arith.select %104, %101, %105 : vector<2x128xi1>, vector<2x128xf32>
    %cst_35 = arith.constant dense<0xFF800000> : vector<2xf32>
    %107 = vector.multi_reduction <maximumf>, %106, %cst_35 [1] : vector<2x128xf32> to vector<2xf32>
    %108 = vector.shape_cast %107 : vector<2xf32> to vector<2x1xf32>
    %109 = vector.broadcast %108 : vector<2x1xf32> to vector<2x128xf32>
    %110 = arith.subf %106, %109 : vector<2x128xf32>
    %111 = math.exp %110 : vector<2x128xf32>
    %cst_36 = arith.constant dense<0.000000e+00> : vector<2xf32>
    %112 = vector.multi_reduction <add>, %111, %cst_36 [1] : vector<2x128xf32> to vector<2xf32>
    %113 = vector.shape_cast %112 : vector<2xf32> to vector<2x1xf32>
    %114 = math.log %113 : vector<2x1xf32>
    %115 = arith.addf %108, %114 : vector<2x1xf32>
    %116 = arith.negf %101 : vector<2x128xf32>
    %117 = math.exp %116 : vector<2x128xf32>
    %cst_37 = arith.constant 1.000000e+00 : f32
    %118 = vector.broadcast %cst_37 : f32 to vector<2x128xf32>
    %119 = arith.addf %118, %117 : vector<2x128xf32>
    %120 = arith.divf %118, %119 : vector<2x128xf32>
    %121 = vector.broadcast %115 : vector<2x1xf32> to vector<2x128xf32>
    %122 = arith.subf %106, %121 : vector<2x128xf32>
    %c127_i32 = arith.constant 127 : i32
    %123 = vector.broadcast %c127_i32 : i32 to vector<2x128xi32>
    %124 = arith.cmpi eq, %102, %123 : vector<2x128xi32>
    %cst_38 = arith.constant 0.000000e+00 : f32
    %125 = vector.broadcast %cst_38 : f32 to vector<2x128xf32>
    %126 = arith.select %124, %120, %125 : vector<2x128xi1>, vector<2x128xf32>
    %127 = arith.select %104, %122, %126 : vector<2x128xi1>, vector<2x128xf32>
    %c0_39 = arith.constant 0 : index
    %c0_40 = arith.constant 0 : index
    %128 = vector.load %arg9[%c0_39, %c0_40] : memref<2x128xf32, #tpu.memory_space<vmem>>, vector<2x128xf32>
    tpu.vector_store %arg9[%c0_39, %c0_40], %127 {strides = array<i32>} : memref<2x128xf32, #tpu.memory_space<vmem>>, vector<2x128xf32>,
    return
  }
}

</mosaic_0001>

<llo_original>
// kernel: nnetwork_forward.1
$region0: #{nnetwork_forward.1}
  #allocation0 [shape = 'u32[]', space=smem, size = 0x4, offset = 0x4, fixed_abs, tag = 'smem constant byte address 0x4 - core index']
  #allocation1 [shape = 'u32[144,128]{1,0:T(1,128)}', space=vmem, size = 0x12000, scoped, tag = 'internal scratch']
  #allocation2 [shape = 'f32[2,32]{1,0:T(2,128)}', space=vmem, size = 0x400, scoped, tag = 'scratch operand']
  %s0 = inlined_call_operand.vmem [shape: s32[2,1], index: 0, kind: input, shape index: {}]
  %s1 = inlined_call_operand.hbm [shape: f32[50,128], index: 1, kind: input, shape index: {}]
  %s2 = inlined_call_operand.hbm [shape: f32[32,128], index: 2, kind: input, shape index: {}]
  %s3 = inlined_call_operand.vmem [shape: f32[32,128], index: 3, kind: input, shape index: {}]
  %s4 = inlined_call_operand.hbm [shape: f32[32,128], index: 4, kind: input, shape index: {}]
  %s5 = inlined_call_operand.vmem [shape: f32[1,128], index: 5, kind: input, shape index: {}]
  %s6 = inlined_call_operand.vmem [shape: f32[2,1], index: 6, kind: input, shape index: {}]
  %s7 = inlined_call_operand.hbm [shape: f32[32,128], index: 7, kind: input, shape index: {}]
  %s8 = inlined_call_operand.vmem [shape: f32[1,128], index: 8, kind: input, shape index: {}]
  %s9 = inlined_call_operand.vmem [shape: f32[2,128], index: 9, kind: output, shape index: {}]
  %s10 = sld [smem:[#allocation0]]
  $region62: #{nnetwork_forward.1} parent=0
    _
  %s12 = ssub.s32 1, %s10
  %s13 = scalar_select 0, %s12, %s10
  $region1: #{nnetwork_forward.1} parent=0
    #allocation3 [shape = 'u8[28672]{0}', space=vmem, size = 0x7000, scoped, tag = 'input window, operand 1, single buffered']
    #allocation4 [shape = 's32[1]{0}', space=sflag, size = 0x4, scoped, tag = 'scoped memory for nnetwork_forward.1']
    #allocation5 [shape = 'u8[16384]{0}', space=vmem, size = 0x4000, scoped, tag = 'input window, operand 2, single buffered']
    #allocation6 [shape = 's32[1]{0}', space=sflag, size = 0x4, scoped, tag = 'scoped memory for nnetwork_forward.1']
    #allocation7 [shape = 'u8[16384]{0}', space=vmem, size = 0x4000, scoped, tag = 'input window, operand 4, single buffered']
    #allocation8 [shape = 'u8[16384]{0}', space=vmem, size = 0x4000, scoped, tag = 'input window, operand 7, single buffered']
    #allocation9 [shape = 's32[1]{0}', space=sflag, size = 0x4, scoped, tag = 'scoped memory for nnetwork_forward.1']
    %14 = vsyncpa [#allocation4], 0
    %15 = vsyncpa [#allocation6], 0
    %16 = vsyncpa [#allocation9], 0
    // Predicated region
    $region2: #{nnetwork_forward.1} parent=1 // pred_check
      _
    $region3: #{nnetwork_forward.1} parent=1 // pred_check_branch
      %18 = sbr.rel (0) target = $region5
    $region4: #{nnetwork_forward.1} parent=1 // pred_region
      _
    $region5: #{nnetwork_forward.1} parent=1 // pred_fallthru
      _
    // Predicated region
    $region6: #{nnetwork_forward.1} parent=1 // pred_check
      _
    $region7: #{nnetwork_forward.1} parent=1 // pred_check_branch
      %20 = sbr.rel (0) target = $region9
    $region8: #{nnetwork_forward.1} parent=1 // pred_region
      %s22 = ssub.s32 896, 896
      %23 = vsyncadd [#allocation4], %s22
      %s24 = sshll.u32 [#allocation3], 4
      %s25 = int_to_ptr.vmem [resolvable:$true] %s24
      %30 = dma.hbm_to_vmem [thread:$0]  %s1, 896, %s25, [#allocation4], 128, 128, 8
    $region9: #{nnetwork_forward.1} parent=1 // pred_fallthru
      _
    // Predicated region
    $region10: #{nnetwork_forward.1} parent=1 // pred_check
      _
    $region11: #{nnetwork_forward.1} parent=1 // pred_check_branch
      %32 = sbr.rel (0) target = $region13
    $region12: #{nnetwork_forward.1} parent=1 // pred_region
      %s34 = ssub.s32 512, 512
      %35 = vsyncadd [#allocation6], %s34
      %s36 = sshll.u32 [#allocation5], 4
      %s37 = int_to_ptr.vmem [resolvable:$true] %s36
      %42 = dma.hbm_to_vmem [thread:$0]  %s2, 512, %s37, [#allocation6], 128, 128, 8
    $region13: #{nnetwork_forward.1} parent=1 // pred_fallthru
      _
    // Predicated region
    $region14: #{nnetwork_forward.1} parent=1 // pred_check
      _
    $region15: #{nnetwork_forward.1} parent=1 // pred_check_branch
      %44 = sbr.rel (0) target = $region17
    $region16: #{nnetwork_forward.1} parent=1 // pred_region
      _
    $region17: #{nnetwork_forward.1} parent=1 // pred_fallthru
      _
    // Predicated region
    $region18: #{nnetwork_forward.1} parent=1 // pred_check
      _
    $region19: #{nnetwork_forward.1} parent=1 // pred_check_branch
      %46 = sbr.rel (0) target = $region21
    $region20: #{nnetwork_forward.1} parent=1 // pred_region
      %s48 = ssub.s32 512, 512
      %49 = vsyncadd [#allocation6], %s48
      %s50 = sshll.u32 [#allocation7], 4
      %s51 = int_to_ptr.vmem [resolvable:$true] %s50
      %56 = dma.hbm_to_vmem [thread:$0]  %s4, 512, %s51, [#allocation6], 128, 128, 8
    $region21: #{nnetwork_forward.1} parent=1 // pred_fallthru
      _
    // Predicated region
    $region22: #{nnetwork_forward.1} parent=1 // pred_check
      _
    $region23: #{nnetwork_forward.1} parent=1 // pred_check_branch
      %58 = sbr.rel (0) target = $region25
    $region24: #{nnetwork_forward.1} parent=1 // pred_region
      _
    $region25: #{nnetwork_forward.1} parent=1 // pred_fallthru
      _
    // Predicated region
    $region26: #{nnetwork_forward.1} parent=1 // pred_check
      _
    $region27: #{nnetwork_forward.1} parent=1 // pred_check_branch
      %60 = sbr.rel (0) target = $region29
    $region28: #{nnetwork_forward.1} parent=1 // pred_region
      _
    $region29: #{nnetwork_forward.1} parent=1 // pred_fallthru
      _
    // Predicated region
    $region30: #{nnetwork_forward.1} parent=1 // pred_check
      _
    $region31: #{nnetwork_forward.1} parent=1 // pred_check_branch
      %62 = sbr.rel (0) target = $region33
    $region32: #{nnetwork_forward.1} parent=1 // pred_region
      %s64 = ssub.s32 512, 512
      %65 = vsyncadd [#allocation9], %s64
      %s66 = sshll.u32 [#allocation8], 4
      %s67 = int_to_ptr.vmem [resolvable:$true] %s66
      %72 = dma.hbm_to_vmem [thread:$0]  %s7, 512, %s67, [#allocation9], 128, 128, 8
    $region33: #{nnetwork_forward.1} parent=1 // pred_fallthru
      _
    // Predicated region
    $region34: #{nnetwork_forward.1} parent=1 // pred_check
      _
    $region35: #{nnetwork_forward.1} parent=1 // pred_check_branch
      %74 = sbr.rel (0) target = $region37
    $region36: #{nnetwork_forward.1} parent=1 // pred_region
      _
    $region37: #{nnetwork_forward.1} parent=1 // pred_fallthru
      _
    // Predicated region
    $region38: #{nnetwork_forward.1} parent=1 // pred_check
      _
    $region39: #{nnetwork_forward.1} parent=1 // pred_check_branch
      %76 = sbr.rel (0) target = $region41
    $region40: #{nnetwork_forward.1} parent=1 // pred_region
      %77 = dma.done [#allocation4], 896
    $region41: #{nnetwork_forward.1} parent=1 // pred_fallthru
      _
    // Predicated region
    $region42: #{nnetwork_forward.1} parent=1 // pred_check
      _
    $region43: #{nnetwork_forward.1} parent=1 // pred_check_branch
      %79 = sbr.rel (0) target = $region45
    $region44: #{nnetwork_forward.1} parent=1 // pred_region
      %80 = dma.done [#allocation6], 512
    $region45: #{nnetwork_forward.1} parent=1 // pred_fallthru
      _
    // Predicated region
    $region46: #{nnetwork_forward.1} parent=1 // pred_check
      _
    $region47: #{nnetwork_forward.1} parent=1 // pred_check_branch
      %82 = sbr.rel (0) target = $region49
    $region48: #{nnetwork_forward.1} parent=1 // pred_region
      %83 = dma.done [#allocation6], 512
    $region49: #{nnetwork_forward.1} parent=1 // pred_fallthru
      _
    // Predicated region
    $region50: #{nnetwork_forward.1} parent=1 // pred_check
      _
    $region51: #{nnetwork_forward.1} parent=1 // pred_check_branch
      %85 = sbr.rel (0) target = $region53
    $region52: #{nnetwork_forward.1} parent=1 // pred_region
      %86 = dma.done [#allocation9], 512
    $region53: #{nnetwork_forward.1} parent=1 // pred_fallthru
      _
    %v87 = vlaneseq
    %v88 = vand.u32 %v87, 127
    %v89 = vld [vmem:[%s0] sm:$0x3]
    %90 = vset.pattern.permute.xlu0 0
    %91 = vperm.xlu0 %90, %v89
    %v92 = vpop.permute.xlu0 %91
    %vm93 = vcmp.eq.s32.totalorder %v88, %v92
    %v94 = vsel %vm93, 1, 0
    %v95 = vcvt.s32.f32 %v94
    %v96 = vld [vmem:[#allocation3] sm:$0xff]
    %v97 = vld [vmem:[#allocation3 + $0x8] sm:$0xff]
    %v98 = vld [vmem:[#allocation3 + $0x10] sm:$0xff]
    %v99 = vld [vmem:[#allocation3 + $0x18] sm:$0xff]
    %v100 = vld [vmem:[#allocation3 + $0x20] sm:$0xff]
    %v101 = vld [vmem:[#allocation3 + $0x28] sm:$0xff]
    %v102 = vld [vmem:[#allocation3 + $0x30] sm:$0x3]
    %vm103 = vcmask 408576
    %v105 = vsel %vm103, %v95, 0
    %vm107 = vcmask 1041408
    %v109 = vsel %vm107, %v102, 0
    %111 = vmatprep.subr.mxu0 0.0
    %112 = vmatpush1.msra.mxu0 %v96
    %113 = vmatprep.subr.mxu0 0.0
    %114 = vmatpush1.msra.mxu0 %v97
    %115 = vmatprep.subr.mxu0 0.0
    %116 = vmatpush1.msra.mxu0 %v98
    %117 = vmatprep.subr.mxu0 0.0
    %118 = vmatpush1.msra.mxu0 %v99
    %119 = vmatprep.subr.mxu0 0.0
    %120 = vmatpush1.msra.mxu0 %v100
    %121 = vmatprep.subr.mxu0 0.0
    %122 = vmatpush1.msra.mxu0 %v101
    %123 = vmatprep.subr.mxu0 0.0
    %124 = vmatpush1.msra.mxu0 %v109
    %125 = vmatprep.subr.mxu0 0.0
    %126 = vmatpush1.msra.mxu0 0.0
    %127 = vmatprep.subr.mxu0 0.0
    %128 = vmatpush1.msra.mxu0 0.0
    %129 = vmatprep.subr.mxu0 0.0
    %130 = vmatpush1.msra.mxu0 0.0
    %131 = vmatprep.subr.mxu0 0.0
    %132 = vmatpush1.msra.mxu0 0.0
    %133 = vmatprep.subr.mxu0 0.0
    %134 = vmatpush1.msra.mxu0 0.0
    %135 = vmatprep.subr.mxu0 0.0
    %136 = vmatpush1.msra.mxu0 0.0
    %137 = vmatprep.subr.mxu0 0.0
    %138 = vmatpush1.msra.mxu0 0.0
    %139 = vmatprep.subr.mxu0 0.0
    %140 = vmatpush1.msra.mxu0 0.0
    %141 = vmatprep.subr.mxu0 0.0
    %142 = vmatpush1.msra.mxu0 0.0
    %143 = vmatprep.subr.mxu0 0.0
    %144 = vmatpush1.msra.mxu0 0.0
    %145 = vmatprep.subr.mxu0 0.0
    %146 = vmatpush1.msra.mxu0 0.0
    %147 = vmatprep.subr.mxu0 0.0
    %148 = vmatpush1.msra.mxu0 0.0
    %149 = vmatprep.subr.mxu0 0.0
    %150 = vmatpush1.msra.mxu0 0.0
    %151 = vmatprep.subr.mxu0 0.0
    %152 = vmatpush1.msra.mxu0 0.0
    %153 = vmatprep.subr.mxu0 0.0
    %154 = vmatpush1.msra.mxu0 0.0
    %155 = vmatprep.subr.mxu0 0.0
    %156 = vmatpush1.msra.mxu0 0.0
    %157 = vmatprep.subr.mxu0 0.0
    %158 = vmatpush1.msra.mxu0 0.0
    %159 = vmatprep.subr.mxu0 0.0
    %160 = vmatpush1.msra.mxu0 0.0
    %161 = vmatprep.subr.mxu0 0.0
    %162 = vmatpush1.msra.mxu0 0.0
    %163 = vmatprep.subr.mxu0 0.0
    %164 = vmatpush1.msra.mxu0 0.0
    %165 = vmatprep.subr.mxu0 0.0
    %166 = vmatpush1.msra.mxu0 0.0
    %167 = vmatprep.subr.mxu0 0.0
    %168 = vmatpush1.msra.mxu0 0.0
    %169 = vmatprep.subr.mxu0 0.0
    %170 = vmatpush1.msra.mxu0 0.0
    %171 = vmatprep.subr.mxu0 0.0
    %172 = vmatpush1.msra.mxu0 0.0
    %173 = vmatprep.subr.mxu0 0.0
    %174 = vmatpush1.msra.mxu0 0.0
    %175 = vmatprep.mubr.f32.mxu0 0.0
    %176 = vmatmul.mubr.f32.gmra.mrb[0].mxu0 %v105
    %v177 = vpop.f32.mrb[0].mxu0
    %v178 = vadd.f32 0.0, %v177
    %v179 = vpop.f32.mrb[0].mxu0
    %180 = vdwg.mxu0
    %v181 = vld [vmem:[#allocation5] sm:$0xff]
    %v182 = vld [vmem:[#allocation5 + $0x8] sm:$0xff]
    %v183 = vld [vmem:[#allocation5 + $0x10] sm:$0xff]
    %v184 = vld [vmem:[#allocation5 + $0x18] sm:$0xff]
    %v185 = vld [vmem:[%s3] sm:$0xff]
    %v186 = vld [vmem:[%s3 + $0x8] sm:$0xff]
    %v187 = vld [vmem:[%s3 + $0x10] sm:$0xff]
    %v188 = vld [vmem:[%s3 + $0x18] sm:$0xff]
    %v189 = vld [vmem:[#allocation7] sm:$0xff]
    %v190 = vld [vmem:[#allocation7 + $0x8] sm:$0xff]
    %v191 = vld [vmem:[#allocation7 + $0x10] sm:$0xff]
    %v192 = vld [vmem:[#allocation7 + $0x18] sm:$0xff]
    %v193 = vld [vmem:[%s5] sm:$0x1]
    %vm194 = vcmask 261120
    %v196 = vsel %vm194, 0.0, 0
    %198 = vmatprep.subr.mxu0 0.0
    %199 = vmatpush1.msra.mxu0 %v181
    %200 = vmatprep.subr.mxu0 0.0
    %201 = vmatpush1.msra.mxu0 %v182
    %202 = vmatprep.subr.mxu0 0.0
    %203 = vmatpush1.msra.mxu0 %v183
    %204 = vmatprep.subr.mxu0 0.0
    %205 = vmatpush1.msra.mxu0 %v184
    %206 = vmatprep.subr.mxu0 0.0
    %207 = vmatpush1.msra.mxu0 0.0
    %208 = vmatprep.subr.mxu0 0.0
    %209 = vmatpush1.msra.mxu0 0.0
    %210 = vmatprep.subr.mxu0 0.0
    %211 = vmatpush1.msra.mxu0 0.0
    %212 = vmatprep.subr.mxu0 0.0
    %213 = vmatpush1.msra.mxu0 0.0
    %214 = vmatprep.subr.mxu0 0.0
    %215 = vmatpush1.msra.mxu0 0.0
    %216 = vmatprep.subr.mxu0 0.0
    %217 = vmatpush1.msra.mxu0 0.0
    %218 = vmatprep.subr.mxu0 0.0
    %219 = vmatpush1.msra.mxu0 0.0
    %220 = vmatprep.subr.mxu0 0.0
    %221 = vmatpush1.msra.mxu0 0.0
    %222 = vmatprep.subr.mxu0 0.0
    %223 = vmatpush1.msra.mxu0 0.0
    %224 = vmatprep.subr.mxu0 0.0
    %225 = vmatpush1.msra.mxu0 0.0
    %226 = vmatprep.subr.mxu0 0.0
    %227 = vmatpush1.msra.mxu0 0.0
    %228 = vmatprep.subr.mxu0 0.0
    %229 = vmatpush1.msra.mxu0 0.0
    %230 = vmatprep.subr.mxu0 0.0
    %231 = vmatpush1.msra.mxu0 0.0
    %232 = vmatprep.subr.mxu0 0.0
    %233 = vmatpush1.msra.mxu0 0.0
    %234 = vmatprep.subr.mxu0 0.0
    %235 = vmatpush1.msra.mxu0 0.0
    %236 = vmatprep.subr.mxu0 0.0
    %237 = vmatpush1.msra.mxu0 0.0
    %238 = vmatprep.subr.mxu0 0.0
    %239 = vmatpush1.msra.mxu0 0.0
    %240 = vmatprep.subr.mxu0 0.0
    %241 = vmatpush1.msra.mxu0 0.0
    %242 = vmatprep.subr.mxu0 0.0
    %243 = vmatpush1.msra.mxu0 0.0
    %244 = vmatprep.subr.mxu0 0.0
    %245 = vmatpush1.msra.mxu0 0.0
    %246 = vmatprep.subr.mxu0 0.0
    %247 = vmatpush1.msra.mxu0 0.0
    %248 = vmatprep.subr.mxu0 0.0
    %249 = vmatpush1.msra.mxu0 0.0
    %250 = vmatprep.subr.mxu0 0.0
    %251 = vmatpush1.msra.mxu0 0.0
    %252 = vmatprep.subr.mxu0 0.0
    %253 = vmatpush1.msra.mxu0 0.0
    %254 = vmatprep.subr.mxu0 0.0
    %255 = vmatpush1.msra.mxu0 0.0
    %256 = vmatprep.subr.mxu0 0.0
    %257 = vmatpush1.msra.mxu0 0.0
    %258 = vmatprep.subr.mxu0 0.0
    %259 = vmatpush1.msra.mxu0 0.0
    %260 = vmatprep.subr.mxu0 0.0
    %261 = vmatpush1.msra.mxu0 0.0
    %262 = vmatprep.mubr.f32.mxu0 0.0
    %263 = vmatmul.mubr.f32.gmra.mrb[0].mxu0 %v196
    %v264 = vpop.f32.mrb[0].mxu0
    %v265 = vadd.f32 0.0, %v264
    %v266 = vpop.f32.mrb[0].mxu0
    %267 = vdwg.mxu0
    %v268 = vadd.f32 %v178, %v265
    %v269 = vxor.u32 %v268, 2147483648
    %v270 = vmul.f32 %v269, 1.442695
    %v271 = vpow.pop %v270
    %v272 = vadd.f32 %v271, 1.0
    %v273 = vrcp.pop %v272
    %v274 = vmul.f32 1.0, %v273
    %v275 = vtanh.pop %v268
    %v276 = vmul.f32 %v274, 0.0
    %278 = vrot.lane.b32.xlu0 %v275, 32
    %v279 = vpop.permute.xlu0 %278
    %v281 = vmul.f32 %v274, %v279
    %283 = vrot.lane.b32.xlu0 %v281, 32
    %v284 = vpop.permute.xlu0 %283
    %v286 = vadd.f32 %v276, %v284
    %v287 = vtanh.pop %v286
    %289 = vrot.lane.b32.xlu0 %v287, 32
    %v290 = vpop.permute.xlu0 %289
    %v292 = vmul.f32 %v274, %v290
    %293 = vmatprep.subr.mxu0 0.0
    %294 = vmatpush1.msra.mxu0 %v189
    %295 = vmatprep.subr.mxu0 0.0
    %296 = vmatpush1.msra.mxu0 %v190
    %297 = vmatprep.subr.mxu0 0.0
    %298 = vmatpush1.msra.mxu0 %v191
    %299 = vmatprep.subr.mxu0 0.0
    %300 = vmatpush1.msra.mxu0 %v192
    %301 = vmatprep.subr.mxu0 0.0
    %302 = vmatpush1.msra.mxu0 0.0
    %303 = vmatprep.subr.mxu0 0.0
    %304 = vmatpush1.msra.mxu0 0.0
    %305 = vmatprep.subr.mxu0 0.0
    %306 = vmatpush1.msra.mxu0 0.0
    %307 = vmatprep.subr.mxu0 0.0
    %308 = vmatpush1.msra.mxu0 0.0
    %309 = vmatprep.subr.mxu0 0.0
    %310 = vmatpush1.msra.mxu0 0.0
    %311 = vmatprep.subr.mxu0 0.0
    %312 = vmatpush1.msra.mxu0 0.0
    %313 = vmatprep.subr.mxu0 0.0
    %314 = vmatpush1.msra.mxu0 0.0
    %315 = vmatprep.subr.mxu0 0.0
    %316 = vmatpush1.msra.mxu0 0.0
    %317 = vmatprep.subr.mxu0 0.0
    %318 = vmatpush1.msra.mxu0 0.0
    %319 = vmatprep.subr.mxu0 0.0
    %320 = vmatpush1.msra.mxu0 0.0
    %321 = vmatprep.subr.mxu0 0.0
    %322 = vmatpush1.msra.mxu0 0.0
    %323 = vmatprep.subr.mxu0 0.0
    %324 = vmatpush1.msra.mxu0 0.0
    %325 = vmatprep.subr.mxu0 0.0
    %326 = vmatpush1.msra.mxu0 0.0
    %327 = vmatprep.subr.mxu0 0.0
    %328 = vmatpush1.msra.mxu0 0.0
    %329 = vmatprep.subr.mxu0 0.0
    %330 = vmatpush1.msra.mxu0 0.0
    %331 = vmatprep.subr.mxu0 0.0
    %332 = vmatpush1.msra.mxu0 0.0
    %333 = vmatprep.subr.mxu0 0.0
    %334 = vmatpush1.msra.mxu0 0.0
    %335 = vmatprep.subr.mxu0 0.0
    %336 = vmatpush1.msra.mxu0 0.0
    %337 = vmatprep.subr.mxu0 0.0
    %338 = vmatpush1.msra.mxu0 0.0
    %339 = vmatprep.subr.mxu0 0.0
    %340 = vmatpush1.msra.mxu0 0.0
    %341 = vmatprep.subr.mxu0 0.0
    %342 = vmatpush1.msra.mxu0 0.0
    %343 = vmatprep.subr.mxu0 0.0
    %344 = vmatpush1.msra.mxu0 0.0
    %345 = vmatprep.subr.mxu0 0.0
    %346 = vmatpush1.msra.mxu0 0.0
    %347 = vmatprep.subr.mxu0 0.0
    %348 = vmatpush1.msra.mxu0 0.0
    %349 = vmatprep.subr.mxu0 0.0
    %350 = vmatpush1.msra.mxu0 0.0
    %351 = vmatprep.subr.mxu0 0.0
    %352 = vmatpush1.msra.mxu0 0.0
    %353 = vmatprep.subr.mxu0 0.0
    %354 = vmatpush1.msra.mxu0 0.0
    %355 = vmatprep.subr.mxu0 0.0
    %356 = vmatpush1.msra.mxu0 0.0
    %357 = vmatprep.mubr.f32.mxu0 0.0
    %358 = vmatmul.mubr.f32.gmra.mrb[0].mxu0 %v196
    %v359 = vpop.f32.mrb[0].mxu0
    %v360 = vadd.f32 0.0, %v359
    %v361 = vpop.f32.mrb[0].mxu0
    %362 = vdwg.mxu0
    %364 = vrot.lane.b32.xlu0 %v292, 64
    %v365 = vpop.permute.xlu0 %364
    %v366 = vsel %vm194, %v365, 0
    %368 = vmatprep.subr.mxu0 0.0
    %369 = vmatpush1.msra.mxu0 %v185
    %370 = vmatprep.subr.mxu0 0.0
    %371 = vmatpush1.msra.mxu0 %v186
    %372 = vmatprep.subr.mxu0 0.0
    %373 = vmatpush1.msra.mxu0 %v187
    %374 = vmatprep.subr.mxu0 0.0
    %375 = vmatpush1.msra.mxu0 %v188
    %376 = vmatprep.subr.mxu0 0.0
    %377 = vmatpush1.msra.mxu0 0.0
    %378 = vmatprep.subr.mxu0 0.0
    %379 = vmatpush1.msra.mxu0 0.0
    %380 = vmatprep.subr.mxu0 0.0
    %381 = vmatpush1.msra.mxu0 0.0
    %382 = vmatprep.subr.mxu0 0.0
    %383 = vmatpush1.msra.mxu0 0.0
    %384 = vmatprep.subr.mxu0 0.0
    %385 = vmatpush1.msra.mxu0 0.0
    %386 = vmatprep.subr.mxu0 0.0
    %387 = vmatpush1.msra.mxu0 0.0
    %388 = vmatprep.subr.mxu0 0.0
    %389 = vmatpush1.msra.mxu0 0.0
    %390 = vmatprep.subr.mxu0 0.0
    %391 = vmatpush1.msra.mxu0 0.0
    %392 = vmatprep.subr.mxu0 0.0
    %393 = vmatpush1.msra.mxu0 0.0
    %394 = vmatprep.subr.mxu0 0.0
    %395 = vmatpush1.msra.mxu0 0.0
    %396 = vmatprep.subr.mxu0 0.0
    %397 = vmatpush1.msra.mxu0 0.0
    %398 = vmatprep.subr.mxu0 0.0
    %399 = vmatpush1.msra.mxu0 0.0
    %400 = vmatprep.subr.mxu0 0.0
    %401 = vmatpush1.msra.mxu0 0.0
    %402 = vmatprep.subr.mxu0 0.0
    %403 = vmatpush1.msra.mxu0 0.0
    %404 = vmatprep.subr.mxu0 0.0
    %405 = vmatpush1.msra.mxu0 0.0
    %406 = vmatprep.subr.mxu0 0.0
    %407 = vmatpush1.msra.mxu0 0.0
    %408 = vmatprep.subr.mxu0 0.0
    %409 = vmatpush1.msra.mxu0 0.0
    %410 = vmatprep.subr.mxu0 0.0
    %411 = vmatpush1.msra.mxu0 0.0
    %412 = vmatprep.subr.mxu0 0.0
    %413 = vmatpush1.msra.mxu0 0.0
    %414 = vmatprep.subr.mxu0 0.0
    %415 = vmatpush1.msra.mxu0 0.0
    %416 = vmatprep.subr.mxu0 0.0
    %417 = vmatpush1.msra.mxu0 0.0
    %418 = vmatprep.subr.mxu0 0.0
    %419 = vmatpush1.msra.mxu0 0.0
    %420 = vmatprep.subr.mxu0 0.0
    %421 = vmatpush1.msra.mxu0 0.0
    %422 = vmatprep.subr.mxu0 0.0
    %423 = vmatpush1.msra.mxu0 0.0
    %424 = vmatprep.subr.mxu0 0.0
    %425 = vmatpush1.msra.mxu0 0.0
    %426 = vmatprep.subr.mxu0 0.0
    %427 = vmatpush1.msra.mxu0 0.0
    %428 = vmatprep.subr.mxu0 0.0
    %429 = vmatpush1.msra.mxu0 0.0
    %430 = vmatprep.subr.mxu0 0.0
    %431 = vmatpush1.msra.mxu0 0.0
    %432 = vmatprep.mubr.f32.mxu0 0.0
    %433 = vmatmul.mubr.f32.gmra.mrb[0].mxu0 %v366
    %v434 = vpop.f32.mrb[0].mxu0
    %v435 = vadd.f32 %v360, %v434
    %v436 = vpop.f32.mrb[0].mxu0
    %437 = vdwg.mxu0
    %v438 = vadd.f32 %v435, %v193
    %v439 = vxor.u32 %v438, 2147483648
    %v440 = vmul.f32 %v439, 1.442695
    %v441 = vpow.pop %v440
    %v442 = vadd.f32 %v441, 1.0
    %v443 = vrcp.pop %v442
    %v444 = vmul.f32 1.0, %v443
    %v445 = vtanh.pop %v438
    %v446 = vmul.f32 %v444, 0.0
    %448 = vrot.lane.b32.xlu0 %v445, 32
    %v449 = vpop.permute.xlu0 %448
    %v451 = vmul.f32 %v444, %v449
    %453 = vrot.lane.b32.xlu0 %v451, 32
    %v454 = vpop.permute.xlu0 %453
    %v456 = vadd.f32 %v446, %v454
    %v457 = vtanh.pop %v456
    %459 = vrot.lane.b32.xlu0 %v457, 32
    %v460 = vpop.permute.xlu0 %459
    %v462 = vmul.f32 %v444, %v460
    %464 = vrot.lane.b32.xlu0 %v462, 64
    %v465 = vpop.permute.xlu0 %464
    %vm467 = vcmask 253952
    %468 = vst.msk [vmem:[#allocation2] sm:$0x1] %vm467, %v465
    %469 = vmatprep.subr.mxu0 0.0
    %470 = vmatpush1.msra.mxu0 %v181
    %471 = vmatprep.subr.mxu0 0.0
    %472 = vmatpush1.msra.mxu0 %v182
    %473 = vmatprep.subr.mxu0 0.0
    %474 = vmatpush1.msra.mxu0 %v183
    %475 = vmatprep.subr.mxu0 0.0
    %476 = vmatpush1.msra.mxu0 %v184
    %477 = vmatprep.subr.mxu0 0.0
    %478 = vmatpush1.msra.mxu0 0.0
    %479 = vmatprep.subr.mxu0 0.0
    %480 = vmatpush1.msra.mxu0 0.0
    %481 = vmatprep.subr.mxu0 0.0
    %482 = vmatpush1.msra.mxu0 0.0
    %483 = vmatprep.subr.mxu0 0.0
    %484 = vmatpush1.msra.mxu0 0.0
    %485 = vmatprep.subr.mxu0 0.0
    %486 = vmatpush1.msra.mxu0 0.0
    %487 = vmatprep.subr.mxu0 0.0
    %488 = vmatpush1.msra.mxu0 0.0
    %489 = vmatprep.subr.mxu0 0.0
    %490 = vmatpush1.msra.mxu0 0.0
    %491 = vmatprep.subr.mxu0 0.0
    %492 = vmatpush1.msra.mxu0 0.0
    %493 = vmatprep.subr.mxu0 0.0
    %494 = vmatpush1.msra.mxu0 0.0
    %495 = vmatprep.subr.mxu0 0.0
    %496 = vmatpush1.msra.mxu0 0.0
    %497 = vmatprep.subr.mxu0 0.0
    %498 = vmatpush1.msra.mxu0 0.0
    %499 = vmatprep.subr.mxu0 0.0
    %500 = vmatpush1.msra.mxu0 0.0
    %501 = vmatprep.subr.mxu0 0.0
    %502 = vmatpush1.msra.mxu0 0.0
    %503 = vmatprep.subr.mxu0 0.0
    %504 = vmatpush1.msra.mxu0 0.0
    %505 = vmatprep.subr.mxu0 0.0
    %506 = vmatpush1.msra.mxu0 0.0
    %507 = vmatprep.subr.mxu0 0.0
    %508 = vmatpush1.msra.mxu0 0.0
    %509 = vmatprep.subr.mxu0 0.0
    %510 = vmatpush1.msra.mxu0 0.0
    %511 = vmatprep.subr.mxu0 0.0
    %512 = vmatpush1.msra.mxu0 0.0
    %513 = vmatprep.subr.mxu0 0.0
    %514 = vmatpush1.msra.mxu0 0.0
    %515 = vmatprep.subr.mxu0 0.0
    %516 = vmatpush1.msra.mxu0 0.0
    %517 = vmatprep.subr.mxu0 0.0
    %518 = vmatpush1.msra.mxu0 0.0
    %519 = vmatprep.subr.mxu0 0.0
    %520 = vmatpush1.msra.mxu0 0.0
    %521 = vmatprep.subr.mxu0 0.0
    %522 = vmatpush1.msra.mxu0 0.0
    %523 = vmatprep.subr.mxu0 0.0
    %524 = vmatpush1.msra.mxu0 0.0
    %525 = vmatprep.subr.mxu0 0.0
    %526 = vmatpush1.msra.mxu0 0.0
    %527 = vmatprep.subr.mxu0 0.0
    %528 = vmatpush1.msra.mxu0 0.0
    %529 = vmatprep.subr.mxu0 0.0
    %530 = vmatpush1.msra.mxu0 0.0
    %531 = vmatprep.subr.mxu0 0.0
    %532 = vmatpush1.msra.mxu0 0.0
    %533 = vmatprep.mubr.f32.mxu0 0.0
    %534 = vmatmul.mubr.f32.gmra.mrb[0].mxu0 %v366
    %v535 = vpop.f32.mrb[0].mxu0
    %v536 = vadd.f32 0.0, %v535
    %v537 = vpop.f32.mrb[0].mxu0
    %538 = vdwg.mxu0
    %v540 = vrot.slane %v536, 7
    %v542 = vadd.f32 %v178, %v540
    %v543 = vxor.u32 %v542, 2147483648
    %v544 = vmul.f32 %v543, 1.442695
    %v545 = vpow.pop %v544
    %v546 = vadd.f32 %v545, 1.0
    %v547 = vrcp.pop %v546
    %v548 = vmul.f32 1.0, %v547
    %v549 = vtanh.pop %v542
    %v551 = vrot.slane %v286, 7
    %v553 = vmul.f32 %v548, %v551
    %555 = vrot.lane.b32.xlu0 %v549, 32
    %v556 = vpop.permute.xlu0 %555
    %v558 = vmul.f32 %v548, %v556
    %560 = vrot.lane.b32.xlu0 %v558, 32
    %v561 = vpop.permute.xlu0 %560
    %v563 = vadd.f32 %v553, %v561
    %v564 = vtanh.pop %v563
    %566 = vrot.lane.b32.xlu0 %v564, 32
    %v567 = vpop.permute.xlu0 %566
    %v569 = vmul.f32 %v548, %v567
    %v570 = vsel %vm194, %v465, 0
    %572 = vmatprep.subr.mxu0 0.0
    %573 = vmatpush1.msra.mxu0 %v189
    %574 = vmatprep.subr.mxu0 0.0
    %575 = vmatpush1.msra.mxu0 %v190
    %576 = vmatprep.subr.mxu0 0.0
    %577 = vmatpush1.msra.mxu0 %v191
    %578 = vmatprep.subr.mxu0 0.0
    %579 = vmatpush1.msra.mxu0 %v192
    %580 = vmatprep.subr.mxu0 0.0
    %581 = vmatpush1.msra.mxu0 0.0
    %582 = vmatprep.subr.mxu0 0.0
    %583 = vmatpush1.msra.mxu0 0.0
    %584 = vmatprep.subr.mxu0 0.0
    %585 = vmatpush1.msra.mxu0 0.0
    %586 = vmatprep.subr.mxu0 0.0
    %587 = vmatpush1.msra.mxu0 0.0
    %588 = vmatprep.subr.mxu0 0.0
    %589 = vmatpush1.msra.mxu0 0.0
    %590 = vmatprep.subr.mxu0 0.0
    %591 = vmatpush1.msra.mxu0 0.0
    %592 = vmatprep.subr.mxu0 0.0
    %593 = vmatpush1.msra.mxu0 0.0
    %594 = vmatprep.subr.mxu0 0.0
    %595 = vmatpush1.msra.mxu0 0.0
    %596 = vmatprep.subr.mxu0 0.0
    %597 = vmatpush1.msra.mxu0 0.0
    %598 = vmatprep.subr.mxu0 0.0
    %599 = vmatpush1.msra.mxu0 0.0
    %600 = vmatprep.subr.mxu0 0.0
    %601 = vmatpush1.msra.mxu0 0.0
    %602 = vmatprep.subr.mxu0 0.0
    %603 = vmatpush1.msra.mxu0 0.0
    %604 = vmatprep.subr.mxu0 0.0
    %605 = vmatpush1.msra.mxu0 0.0
    %606 = vmatprep.subr.mxu0 0.0
    %607 = vmatpush1.msra.mxu0 0.0
    %608 = vmatprep.subr.mxu0 0.0
    %609 = vmatpush1.msra.mxu0 0.0
    %610 = vmatprep.subr.mxu0 0.0
    %611 = vmatpush1.msra.mxu0 0.0
    %612 = vmatprep.subr.mxu0 0.0
    %613 = vmatpush1.msra.mxu0 0.0
    %614 = vmatprep.subr.mxu0 0.0
    %615 = vmatpush1.msra.mxu0 0.0
    %616 = vmatprep.subr.mxu0 0.0
    %617 = vmatpush1.msra.mxu0 0.0
    %618 = vmatprep.subr.mxu0 0.0
    %619 = vmatpush1.msra.mxu0 0.0
    %620 = vmatprep.subr.mxu0 0.0
    %621 = vmatpush1.msra.mxu0 0.0
    %622 = vmatprep.subr.mxu0 0.0
    %623 = vmatpush1.msra.mxu0 0.0
    %624 = vmatprep.subr.mxu0 0.0
    %625 = vmatpush1.msra.mxu0 0.0
    %626 = vmatprep.subr.mxu0 0.0
    %627 = vmatpush1.msra.mxu0 0.0
    %628 = vmatprep.subr.mxu0 0.0
    %629 = vmatpush1.msra.mxu0 0.0
    %630 = vmatprep.subr.mxu0 0.0
    %631 = vmatpush1.msra.mxu0 0.0
    %632 = vmatprep.subr.mxu0 0.0
    %633 = vmatpush1.msra.mxu0 0.0
    %634 = vmatprep.subr.mxu0 0.0
    %635 = vmatpush1.msra.mxu0 0.0
    %636 = vmatprep.mubr.f32.mxu0 0.0
    %637 = vmatmul.mubr.f32.gmra.mrb[0].mxu0 %v570
    %v638 = vpop.f32.mrb[0].mxu0
    %v639 = vadd.f32 0.0, %v638
    %v640 = vpop.f32.mrb[0].mxu0
    %641 = vdwg.mxu0
    %v643 = vrot.slane %v569, 1
    %644 = vrot.lane.b32.xlu0 %v643, 64
    %v645 = vpop.permute.xlu0 %644
    %v646 = vsel %vm194, %v645, 0
    %648 = vmatprep.subr.mxu0 0.0
    %649 = vmatpush1.msra.mxu0 %v185
    %650 = vmatprep.subr.mxu0 0.0
    %651 = vmatpush1.msra.mxu0 %v186
    %652 = vmatprep.subr.mxu0 0.0
    %653 = vmatpush1.msra.mxu0 %v187
    %654 = vmatprep.subr.mxu0 0.0
    %655 = vmatpush1.msra.mxu0 %v188
    %656 = vmatprep.subr.mxu0 0.0
    %657 = vmatpush1.msra.mxu0 0.0
    %658 = vmatprep.subr.mxu0 0.0
    %659 = vmatpush1.msra.mxu0 0.0
    %660 = vmatprep.subr.mxu0 0.0
    %661 = vmatpush1.msra.mxu0 0.0
    %662 = vmatprep.subr.mxu0 0.0
    %663 = vmatpush1.msra.mxu0 0.0
    %664 = vmatprep.subr.mxu0 0.0
    %665 = vmatpush1.msra.mxu0 0.0
    %666 = vmatprep.subr.mxu0 0.0
    %667 = vmatpush1.msra.mxu0 0.0
    %668 = vmatprep.subr.mxu0 0.0
    %669 = vmatpush1.msra.mxu0 0.0
    %670 = vmatprep.subr.mxu0 0.0
    %671 = vmatpush1.msra.mxu0 0.0
    %672 = vmatprep.subr.mxu0 0.0
    %673 = vmatpush1.msra.mxu0 0.0
    %674 = vmatprep.subr.mxu0 0.0
    %675 = vmatpush1.msra.mxu0 0.0
    %676 = vmatprep.subr.mxu0 0.0
    %677 = vmatpush1.msra.mxu0 0.0
    %678 = vmatprep.subr.mxu0 0.0
    %679 = vmatpush1.msra.mxu0 0.0
    %680 = vmatprep.subr.mxu0 0.0
    %681 = vmatpush1.msra.mxu0 0.0
    %682 = vmatprep.subr.mxu0 0.0
    %683 = vmatpush1.msra.mxu0 0.0
    %684 = vmatprep.subr.mxu0 0.0
    %685 = vmatpush1.msra.mxu0 0.0
    %686 = vmatprep.subr.mxu0 0.0
    %687 = vmatpush1.msra.mxu0 0.0
    %688 = vmatprep.subr.mxu0 0.0
    %689 = vmatpush1.msra.mxu0 0.0
    %690 = vmatprep.subr.mxu0 0.0
    %691 = vmatpush1.msra.mxu0 0.0
    %692 = vmatprep.subr.mxu0 0.0
    %693 = vmatpush1.msra.mxu0 0.0
    %694 = vmatprep.subr.mxu0 0.0
    %695 = vmatpush1.msra.mxu0 0.0
    %696 = vmatprep.subr.mxu0 0.0
    %697 = vmatpush1.msra.mxu0 0.0
    %698 = vmatprep.subr.mxu0 0.0
    %699 = vmatpush1.msra.mxu0 0.0
    %700 = vmatprep.subr.mxu0 0.0
    %701 = vmatpush1.msra.mxu0 0.0
    %702 = vmatprep.subr.mxu0 0.0
    %703 = vmatpush1.msra.mxu0 0.0
    %704 = vmatprep.subr.mxu0 0.0
    %705 = vmatpush1.msra.mxu0 0.0
    %706 = vmatprep.subr.mxu0 0.0
    %707 = vmatpush1.msra.mxu0 0.0
    %708 = vmatprep.subr.mxu0 0.0
    %709 = vmatpush1.msra.mxu0 0.0
    %710 = vmatprep.subr.mxu0 0.0
    %711 = vmatpush1.msra.mxu0 0.0
    %712 = vmatprep.mubr.f32.mxu0 0.0
    %713 = vmatmul.mubr.f32.gmra.mrb[0].mxu0 %v646
    %v714 = vpop.f32.mrb[0].mxu0
    %v715 = vadd.f32 %v639, %v714
    %v716 = vpop.f32.mrb[0].mxu0
    %717 = vdwg.mxu0
    %v718 = vadd.f32 %v715, %v193
    %v719 = vxor.u32 %v718, 2147483648
    %v720 = vmul.f32 %v719, 1.442695
    %v721 = vpow.pop %v720
    %v722 = vadd.f32 %v721, 1.0
    %v723 = vrcp.pop %v722
    %v724 = vmul.f32 1.0, %v723
    %v725 = vtanh.pop %v718
    %v726 = vmul.f32 %v724, %v456
    %728 = vrot.lane.b32.xlu0 %v725, 32
    %v729 = vpop.permute.xlu0 %728
    %v731 = vmul.f32 %v724, %v729
    %733 = vrot.lane.b32.xlu0 %v731, 32
    %v734 = vpop.permute.xlu0 %733
    %v736 = vadd.f32 %v726, %v734
    %v737 = vtanh.pop %v736
    %739 = vrot.lane.b32.xlu0 %v737, 32
    %v740 = vpop.permute.xlu0 %739
    %v742 = vmul.f32 %v724, %v740
    %744 = vrot.lane.b32.xlu0 %v742, 64
    %v745 = vpop.permute.xlu0 %744
    %747 = vst.msk [vmem:[#allocation2 + $0x1] sm:$0x1] %vm467, %v745
    %v748 = vld [vmem:[#allocation2] sm:$0x3]
    %v749 = vld [vmem:[%s6] sm:$0x3]
    %751 = vset.pattern.permute.xlu0 0
    %752 = vperm.xlu0 %751, %v749
    %v753 = vpop.permute.xlu0 %752
    %v755 = vmul.f32 %v748, %v753
    %v756 = vld [vmem:[#allocation8] sm:$0xff]
    %v757 = vld [vmem:[#allocation8 + $0x8] sm:$0xff]
    %v758 = vld [vmem:[#allocation8 + $0x10] sm:$0xff]
    %v759 = vld [vmem:[#allocation8 + $0x18] sm:$0xff]
    %v760 = vld [vmem:[%s8] sm:$0x1]
    %v762 = vlaneseq
    %v763 = vshrl.u32 %v762, 7
    %v764 = vsub.s32 0, %v763
    %v765 = vrot.slane %v760, %v764
    %v768 = vsel %vm194, %v755, 0
    %770 = vmatprep.subr.mxu0 0.0
    %771 = vmatpush1.msra.mxu0 %v756
    %772 = vmatprep.subr.mxu0 0.0
    %773 = vmatpush1.msra.mxu0 %v757
    %774 = vmatprep.subr.mxu0 0.0
    %775 = vmatpush1.msra.mxu0 %v758
    %776 = vmatprep.subr.mxu0 0.0
    %777 = vmatpush1.msra.mxu0 %v759
    %778 = vmatprep.subr.mxu0 0.0
    %779 = vmatpush1.msra.mxu0 0.0
    %780 = vmatprep.subr.mxu0 0.0
    %781 = vmatpush1.msra.mxu0 0.0
    %782 = vmatprep.subr.mxu0 0.0
    %783 = vmatpush1.msra.mxu0 0.0
    %784 = vmatprep.subr.mxu0 0.0
    %785 = vmatpush1.msra.mxu0 0.0
    %786 = vmatprep.subr.mxu0 0.0
    %787 = vmatpush1.msra.mxu0 0.0
    %788 = vmatprep.subr.mxu0 0.0
    %789 = vmatpush1.msra.mxu0 0.0
    %790 = vmatprep.subr.mxu0 0.0
    %791 = vmatpush1.msra.mxu0 0.0
    %792 = vmatprep.subr.mxu0 0.0
    %793 = vmatpush1.msra.mxu0 0.0
    %794 = vmatprep.subr.mxu0 0.0
    %795 = vmatpush1.msra.mxu0 0.0
    %796 = vmatprep.subr.mxu0 0.0
    %797 = vmatpush1.msra.mxu0 0.0
    %798 = vmatprep.subr.mxu0 0.0
    %799 = vmatpush1.msra.mxu0 0.0
    %800 = vmatprep.subr.mxu0 0.0
    %801 = vmatpush1.msra.mxu0 0.0
    %802 = vmatprep.subr.mxu0 0.0
    %803 = vmatpush1.msra.mxu0 0.0
    %804 = vmatprep.subr.mxu0 0.0
    %805 = vmatpush1.msra.mxu0 0.0
    %806 = vmatprep.subr.mxu0 0.0
    %807 = vmatpush1.msra.mxu0 0.0
    %808 = vmatprep.subr.mxu0 0.0
    %809 = vmatpush1.msra.mxu0 0.0
    %810 = vmatprep.subr.mxu0 0.0
    %811 = vmatpush1.msra.mxu0 0.0
    %812 = vmatprep.subr.mxu0 0.0
    %813 = vmatpush1.msra.mxu0 0.0
    %814 = vmatprep.subr.mxu0 0.0
    %815 = vmatpush1.msra.mxu0 0.0
    %816 = vmatprep.subr.mxu0 0.0
    %817 = vmatpush1.msra.mxu0 0.0
    %818 = vmatprep.subr.mxu0 0.0
    %819 = vmatpush1.msra.mxu0 0.0
    %820 = vmatprep.subr.mxu0 0.0
    %821 = vmatpush1.msra.mxu0 0.0
    %822 = vmatprep.subr.mxu0 0.0
    %823 = vmatpush1.msra.mxu0 0.0
    %824 = vmatprep.subr.mxu0 0.0
    %825 = vmatpush1.msra.mxu0 0.0
    %826 = vmatprep.subr.mxu0 0.0
    %827 = vmatpush1.msra.mxu0 0.0
    %828 = vmatprep.subr.mxu0 0.0
    %829 = vmatpush1.msra.mxu0 0.0
    %830 = vmatprep.subr.mxu0 0.0
    %831 = vmatpush1.msra.mxu0 0.0
    %832 = vmatprep.subr.mxu0 0.0
    %833 = vmatpush1.msra.mxu0 0.0
    %834 = vmatprep.mubr.f32.mxu0 0.0
    %835 = vmatmul.mubr.f32.gmra.mrb[0].mxu0 %v768
    %v836 = vpop.f32.mrb[0].mxu0
    %v837 = vadd.f32 %v765, %v836
    %v838 = vpop.f32.mrb[0].mxu0
    %839 = vdwg.mxu0
    %vm840 = vcmp.lt.s32.totalorder %v88, 5
    %v841 = vsel %vm840, %v837, -1e+30
    %v842 = vsel %vm107, %v841, -inf
    %843 = vmax.xlane.f32.xlu0 %v842
    %v844 = vpop.xlane.xlu0 %843
    %v845 = vsub.f32 %v841, %v844
    %v846 = vmul.f32 %v845, 1.442695
    %v847 = vpow.pop %v846
    %v848 = vsel %vm107, %v847, 0.0
    %849 = vadd.xlane.f32.xlu0 %v848
    %v850 = vpop.xlane.xlu0 %849
    %v851 = vlog2.pop %v850
    %v852 = vmul.f32 %v851, 0.6931472
    %v853 = vadd.f32 %v844, %v852
    %v854 = vxor.u32 %v837, 2147483648
    %v855 = vmul.f32 %v854, 1.442695
    %v856 = vpow.pop %v855
    %v857 = vadd.f32 %v856, 1.0
    %v858 = vrcp.pop %v857
    %v859 = vmul.f32 1.0, %v858
    %v860 = vsub.f32 %v841, %v853
    %vm861 = vcmp.eq.s32.totalorder %v88, 127
    %v862 = vsel %vm861, %v859, 0.0
    %v863 = vsel %vm840, %v860, %v862
    %864 = vst [vmem:[%s9] sm:$0x3] %v863
    // Predicated region
    $region54: #{nnetwork_forward.1} parent=1 // pred_check
      _
    $region55: #{nnetwork_forward.1} parent=1 // pred_check_branch
      %866 = sbr.rel (0) target = $region57
    $region56: #{nnetwork_forward.1} parent=1 // pred_region
      _
    $region57: #{nnetwork_forward.1} parent=1 // pred_fallthru
      _
    // Predicated region
    $region58: #{nnetwork_forward.1} parent=1 // pred_check
      _
    $region59: #{nnetwork_forward.1} parent=1 // pred_check_branch
      %868 = sbr.rel (0) target = $region61
    $region60: #{nnetwork_forward.1} parent=1 // pred_region
      _
    $region61: #{nnetwork_forward.1} parent=1 // pred_fallthru
      _
    %869 = vsyncpa [#allocation4], 1
    %870 = vsyncpa [#allocation6], 1
    %871 = vsyncpa [#allocation9], 1

</llo_original>
